<compile_context>
chip_gen: v7x
topology: tpu7x:2x2x1
jax: 0.10.0
libtpu: 0.0.40
codegen_flags: <defaults>
</compile_context>

<pallas_src>
import jax
import jax.numpy as jnp
from jax import lax
from jax.experimental import pallas as pl
from jax.experimental.pallas import tpu as pltpu

_SQRT_HALF = 0.7071067811865476  # 1/sqrt(2)
_LANE = 128
_SUBLANE = 8


def _round_up(x, m):
    return ((x + m - 1) // m) * m


def _vmem_budget_bytes():
    """Generation-aware VMEM budget (~75% of physical: ~48 MiB v7x, ~96 MiB v5e/v6e)."""
    try:
        cap = int(pltpu.get_tpu_info().vmem_capacity_bytes)
    except Exception:
        cap = 64 * 1024 * 1024  # conservative (v7x-sized) fallback
    return (cap * 3) // 4


def _footprint_bytes(tm, th, dim, itemsize, n_k):
    """VMEM needed for one grid step: double-buffered pipeline tiles plus the
    f32 GELU intermediate, its cast copy, the f32 partial-dot result and acc."""
    w_bytes = 2 * (dim * th + th * dim + th + dim) * itemsize   # w1, w2, b1, b2 (x2 bufs)
    x_bytes = 2 * tm * dim * itemsize                           # x tile (x2 bufs)
    o_bytes = 2 * tm * dim * itemsize                           # out tile (x2 bufs)
    gelu_bytes = tm * th * 4 + tm * th * itemsize               # f32 h + cast copy
    partial_bytes = tm * dim * 4                                # second-dot f32 result
    acc_bytes = tm * dim * 4 if n_k > 1 else _SUBLANE * _LANE * 4
    return w_bytes + x_bytes + o_bytes + gelu_bytes + partial_bytes + acc_bytes


def _choose_config(M, dim, hidden, itemsize, vmem_budget):
    """Pick (tm, th, hidden_padded, n_k).

    Prefers fully VMEM-resident weights (th == hidden, n_k == 1) so the weight
    matrices are streamed from HBM once; otherwise maximizes the row tile to
    raise arithmetic intensity of the weight re-streaming scheme."""
    tm_cap = max(_SUBLANE, _round_up(min(M, 1024), _SUBLANE))
    tm_cands = [t for t in (1024, 768, 512, 384, 256, 192, 128, 64, 32, 16, 8)
                if t <= tm_cap]
    if not tm_cands or tm_cands[0] < tm_cap:
        tm_cands = [tm_cap] + tm_cands

    th_cands = [hidden] + [t for t in (4096, 3072, 2048, 1536, 1024, 768, 512, 384, 256, 128)
                           if t < hidden]

    best = None
    for th in th_cands:
        hidden_p = hidden if th == hidden else _round_up(hidden, th)
        if th != hidden and (hidden_p - hidden) * 4 > hidden:
            continue  # would waste >25% of the hidden dim on zero padding
        n_k = hidden_p // th
        for tm in tm_cands:
            if _footprint_bytes(tm, th, dim, itemsize, n_k) <= vmem_budget:
                cand = (tm, th, hidden_p, n_k)
                if n_k == 1 and tm >= min(tm_cap, 256):
                    return cand          # resident weights + healthy row tile
                if best is None or tm > best[0]:
                    best = cand
                break                    # largest fitting tm for this th found
    if best is None:
        hp = _round_up(hidden, _LANE)
        best = (_SUBLANE, _LANE, hp, hp // _LANE)
    return best


def _make_ffn_kernel(n_k, approximate_gelu):
    def kernel(x_ref, w1_ref, b1_ref, w2_ref, b2_ref, o_ref, acc_ref):
        # x_ref  : (tm, dim)   row tile (native/compute dtype -> MXU directly)
        # w1_ref : (dim, th)   hidden chunk of first weight
        # b1_ref : (1, th)     hidden chunk of first bias
        # w2_ref : (th, dim)   hidden chunk of second weight
        # b2_ref : (1, dim)    second bias (added only at finalize)
        # o_ref  : (tm, dim)   output row tile (resident across the hidden axis)
        # acc_ref: f32 accumulator scratch (dummy (8,128) when n_k == 1)

        # First linear for this hidden chunk: native-dtype operands, f32 accumulate.
        h = jnp.dot(x_ref[...], w1_ref[...], preferred_element_type=jnp.float32)
        h = h + b1_ref[...].astype(jnp.float32)

        if approximate_gelu:
            h = jax.nn.gelu(h, approximate=True)            # tanh form (EUP slot)
        else:
            h = 0.5 * h * (1.0 + lax.erf(h * _SQRT_HALF))   # exact erf, matches nn.GELU()

        # TODO(synk): Dropout(p>0) in training mode would need pltpu.prng_seed /
        # prng_random_bits per tile; p=0.0 / eval mode -> identity.

        # Partial second linear for this hidden chunk, f32 result.
        partial = jnp.dot(h.astype(w2_ref.dtype), w2_ref[...],
                          preferred_element_type=jnp.float32)
        b2f = b2_ref[...].astype(jnp.float32)

        if n_k == 1:
            # Weights fully VMEM-resident: single reduction step, no accumulator traffic.
            o_ref[...] = (partial + b2f).astype(o_ref.dtype)
        else:
            k = pl.program_id(1)

            @pl.when(k == 0)
            def _first():
                acc_ref[...] = partial            # write, no read

            @pl.when((k > 0) & (k < n_k - 1))
            def _mid():
                acc_ref[...] += partial

            @pl.when(k == n_k - 1)
            def _finalize():
                # Fold last chunk + bias straight into the output store
                # (skips one accumulator read-modify-write pass).
                o_ref[...] = (acc_ref[...] + partial + b2f).astype(o_ref.dtype)

    return kernel


def feed_forward(x, w1, b1, w2, b2, *, dropout=0.0, tm=None, th=None,
                 compute_dtype=None, approximate_gelu=False):
    """x: (B, N, dim). Weights stored already transposed vs torch.nn.Linear:
    w1: (dim, hidden), b1: (hidden,), w2: (hidden, dim), b2: (dim,)."""
    del dropout  # identity for p=0.0 / eval mode; see TODO in the kernel body.

    B, N, dim = x.shape
    hidden = w1.shape[1]
    M = B * N
    out_dtype = x.dtype

    cdtype = jnp.dtype(compute_dtype) if compute_dtype is not None else jnp.dtype(x.dtype)
    itemsize = cdtype.itemsize
    vmem_budget = _vmem_budget_bytes()

    if tm is None or th is None:
        a_tm, a_th, a_hp, a_nk = _choose_config(M, dim, hidden, itemsize, vmem_budget)
    if tm is None:
        tm_eff = a_tm
    else:
        tm_eff = max(_SUBLANE, _round_up(min(tm, _round_up(M, _SUBLANE)), _SUBLANE))
    if th is None:
        th_eff, hidden_p, n_k = a_th, a_hp, a_nk
    else:
        th_eff = hidden if th >= hidden else _round_up(th, _LANE)
        hidden_p = hidden if th_eff == hidden else _round_up(hidden, th_eff)
        n_k = hidden_p // th_eff

    # Guarantee >=2 row tiles (v7x shards the "parallel" axis over 2 TensorCores).
    # Only when weights are resident (n_k == 1): splitting a single row tile when
    # weights are re-streamed per row tile would double HBM weight traffic.
    if n_k == 1 and M > _SUBLANE and pl.cdiv(M, tm_eff) == 1:
        tm_eff = _round_up(pl.cdiv(M, 2), _SUBLANE)

    n_rows = pl.cdiv(M, tm_eff)

    # Flatten tokens. Ragged M is handled by Pallas' masked partial last block
    # (rows are independent), avoiding a full-array pad round-trip through HBM.
    x2d = x.reshape(M, dim)

    # Zero-pad the hidden axis once (weights only) so th_eff divides it exactly;
    # padded hidden units contribute exactly 0 (b1 pad = 0 -> GELU(0) = 0, w2 rows = 0).
    if hidden_p != hidden:
        w1 = jnp.pad(w1, ((0, 0), (0, hidden_p - hidden)))
        b1 = jnp.pad(b1, ((0, hidden_p - hidden),))
        w2 = jnp.pad(w2, ((0, hidden_p - hidden), (0, 0)))

    if compute_dtype is not None:
        x2d = x2d.astype(cdtype)
        w1 = w1.astype(cdtype)
        w2 = w2.astype(cdtype)

    b1_2d = b1.reshape(1, hidden_p)
    b2_2d = b2.reshape(1, dim)

    footprint = _footprint_bytes(tm_eff, th_eff, dim, itemsize, n_k)
    vmem_limit = int(min(max(int(footprint * 1.2), 16 * 1024 * 1024), vmem_budget))

    weight_streams = 1 if n_k == 1 else n_rows  # actual HBM weight traffic multiplier
    cost = pl.CostEstimate(
        flops=int(4 * M * dim * hidden_p),
        transcendentals=int(M * hidden_p),
        bytes_accessed=int(itemsize * (2 * M * dim)
                           + itemsize * weight_streams * (2 * dim * hidden_p + hidden_p + dim)),
    )

    acc_shape = (tm_eff, dim) if n_k > 1 else (_SUBLANE, _LANE)

    out = pl.pallas_call(
        _make_ffn_kernel(n_k, approximate_gelu),
        out_shape=jax.ShapeDtypeStruct((M, dim), out_dtype),
        grid_spec=pltpu.PrefetchScalarGridSpec(
            num_scalar_prefetch=0,
            grid=(n_rows, n_k),  # row tiles (parallel), hidden reduction last
            in_specs=[
                pl.BlockSpec((tm_eff, dim), lambda i, k: (i, 0)),
                pl.BlockSpec((dim, th_eff), lambda i, k: (0, k)),   # constant when n_k==1
                pl.BlockSpec((1, th_eff), lambda i, k: (0, k)),
                pl.BlockSpec((th_eff, dim), lambda i, k: (k, 0)),   # constant when n_k==1
                pl.BlockSpec((1, dim), lambda i, k: (0, 0)),
            ],
            out_specs=pl.BlockSpec((tm_eff, dim), lambda i, k: (i, 0)),
            scratch_shapes=[pltpu.VMEM(acc_shape, jnp.float32)],
        ),
        compiler_params=pltpu.CompilerParams(
            dimension_semantics=("parallel", "arbitrary"),
            vmem_limit_bytes=vmem_limit,
        ),
        cost_estimate=cost,
    )(x2d, w1, b1_2d, w2, b2_2d)

    return out.reshape(B, N, dim)


def feed_forward_ref(x, w1, b1, w2, b2):
    h = jnp.einsum("bnd,dh->bnh", x, w1) + b1
    h = 0.5 * h * (1.0 + lax.erf(h * _SQRT_HALF))
    return jnp.einsum("bnh,hd->bnd", h, w2) + b2


if __name__ == "__main__":
    key = jax.random.PRNGKey(0)

    def make_params(k, dim, hidden):
        kw1, kb1, kw2, kb2 = jax.random.split(k, 4)
        lim1 = 1.0 / (dim ** 0.5)
        lim2 = 1.0 / (hidden ** 0.5)
        w1 = jax.random.uniform(kw1, (dim, hidden), jnp.float32, -lim1, lim1)
        b1 = jax.random.uniform(kb1, (hidden,), jnp.float32, -lim1, lim1)
        w2 = jax.random.uniform(kw2, (hidden, dim), jnp.float32, -lim2, lim2)
        b2 = jax.random.uniform(kb2, (dim,), jnp.float32, -lim2, lim2)
        return w1, b1, w2, b2

    k1, k2, k3, k4, kp1, kp2, kp3, kp4 = jax.random.split(key, 8)

    # Case 1: tiny shapes, auto config (resident weights, >=2 row tiles).
    B, N, dim, hidden = 2, 8, 32, 64
    x = jax.random.normal(k1, (B, N, dim), dtype=jnp.float32)
    w1, b1, w2, b2 = make_params(kp1, dim, hidden)
    out = jax.block_until_ready(feed_forward(x, w1, b1, w2, b2))
    ref = feed_forward_ref(x, w1, b1, w2, b2)
    assert out.shape == (B, N, dim)
    assert jnp.allclose(out, ref, atol=1e-5, rtol=1e-5), "case1 mismatch vs reference"

    # Case 2: forced hidden tiling (2 reduction steps) + 2 row tiles (accumulate path).
    B, N, dim, hidden = 2, 64, 128, 256
    x = jax.random.normal(k2, (B, N, dim), dtype=jnp.float32)
    w1, b1, w2, b2 = make_params(kp2, dim, hidden)
    out = jax.block_until_ready(feed_forward(x, w1, b1, w2, b2, tm=64, th=128))
    ref = feed_forward_ref(x, w1, b1, w2, b2)
    assert jnp.allclose(out, ref, atol=1e-4, rtol=1e-4), "case2 mismatch vs reference"

    # Case 3: ragged token count (handled by masked partial last block, no jnp.pad of x).
    B, N, dim, hidden = 2, 10, 32, 64
    x = jax.random.normal(k3, (B, N, dim), dtype=jnp.float32)
    w1, b1, w2, b2 = make_params(kp3, dim, hidden)
    out = jax.block_until_ready(feed_forward(x, w1, b1, w2, b2))
    ref = feed_forward_ref(x, w1, b1, w2, b2)
    assert out.shape == (B, N, dim)
    assert jnp.allclose(out, ref, atol=1e-5, rtol=1e-5), "case3 mismatch vs reference"

    # Case 4: bf16 operand path (f32 accumulation), loose tolerance vs f32 reference.
    B, N, dim, hidden = 2, 8, 32, 64
    x = jax.random.normal(k4, (B, N, dim), dtype=jnp.float32)
    w1, b1, w2, b2 = make_params(kp4, dim, hidden)
    out = jax.block_until_ready(
        feed_forward(x, w1, b1, w2, b2, compute_dtype=jnp.bfloat16))
    ref = feed_forward_ref(x, w1, b1, w2, b2)
    assert out.shape == (B, N, dim)
    assert jnp.allclose(out, ref, atol=1e-1, rtol=1e-1), "case4 mismatch vs reference"

    print("KERNEL_OK")
</pallas_src>

<mosaic_0001>
module attributes {stable_mosaic.version = 11 : i64} {
  func.func @kernel(%arg0: i32, %arg1: i32, %arg2: memref<8x32xf32, #tpu.memory_space<vmem>>, %arg3: memref<32x64xf32, #tpu.memory_space<vmem>>, %arg4: memref<1x64xf32, #tpu.memory_space<vmem>>, %arg5: memref<64x32xf32, #tpu.memory_space<vmem>>, %arg6: memref<1x32xf32, #tpu.memory_space<vmem>>, %arg7: memref<8x32xf32, #tpu.memory_space<vmem>>, %arg8: memref<8x128xf32, #tpu.memory_space<vmem>>) attributes {dimension_semantics = [#tpu.dimension_semantics<parallel>, #tpu.dimension_semantics<arbitrary>], iteration_bounds = array<i64: 2, 1>, scalar_prefetch = 0 : i64, scratch_operands = 1 : i64, tpu.core_type = #tpu.core_type<tc>, window_params = [{transform_indices = @transform_0, window_bounds = array<i64: 8, 32>}, {transform_indices = @transform_1, window_bounds = array<i64: 32, 64>}, {transform_indices = @transform_2, window_bounds = array<i64: 1, 64>}, {transform_indices = @transform_3, window_bounds = array<i64: 64, 32>}, {pipeline_mode = #tpu.pipeline_mode<synchronous>, transform_indices = @transform_4, window_bounds = array<i64: 1, 32>}, {transform_indices = @transform_5, window_bounds = array<i64: 8, 32>}]} {
    %c0 = arith.constant 0 : index
    %c0_0 = arith.constant 0 : index
    %0 = vector.load %arg2[%c0, %c0_0] : memref<8x32xf32, #tpu.memory_space<vmem>>, vector<8x32xf32>
    %c0_1 = arith.constant 0 : index
    %c0_2 = arith.constant 0 : index
    %1 = vector.load %arg3[%c0_1, %c0_2] : memref<32x64xf32, #tpu.memory_space<vmem>>, vector<32x64xf32>
    %cst = arith.constant dense<0.000000e+00> : vector<8x64xf32>
    %2 = tpu.matmul %0, %1, %cst {dimension_numbers = #tpu.dot_dimension_numbers<[1], [0], [0], [1], [0, 0, 1, 1], [], []>} : vector<8x32xf32>, vector<32x64xf32>, vector<8x64xf32> -> vector<8x64xf32>
    %c0_3 = arith.constant 0 : index
    %c0_4 = arith.constant 0 : index
    %3 = vector.load %arg4[%c0_3, %c0_4] : memref<1x64xf32, #tpu.memory_space<vmem>>, vector<1x64xf32>
    %4 = vector.broadcast %3 : vector<1x64xf32> to vector<8x64xf32>
    %5 = arith.addf %2, %4 : vector<8x64xf32>
    %cst_5 = arith.constant 5.000000e-01 : f32
    %6 = vector.broadcast %cst_5 : f32 to vector<8x64xf32>
    %7 = arith.mulf %6, %5 : vector<8x64xf32>
    %cst_6 = arith.constant 0.707106769 : f32
    %8 = vector.broadcast %cst_6 : f32 to vector<8x64xf32>
    %9 = arith.mulf %5, %8 : vector<8x64xf32>
    %10 = math.erf %9 : vector<8x64xf32>
    %cst_7 = arith.constant 1.000000e+00 : f32
    %11 = vector.broadcast %cst_7 : f32 to vector<8x64xf32>
    %12 = arith.addf %11, %10 : vector<8x64xf32>
    %13 = arith.mulf %7, %12 : vector<8x64xf32>
    %c0_8 = arith.constant 0 : index
    %c0_9 = arith.constant 0 : index
    %14 = vector.load %arg5[%c0_8, %c0_9] : memref<64x32xf32, #tpu.memory_space<vmem>>, vector<64x32xf32>
    %cst_10 = arith.constant dense<0.000000e+00> : vector<8x32xf32>
    %15 = tpu.matmul %13, %14, %cst_10 {dimension_numbers = #tpu.dot_dimension_numbers<[1], [0], [0], [1], [0, 0, 1, 1], [], []>} : vector<8x64xf32>, vector<64x32xf32>, vector<8x32xf32> -> vector<8x32xf32>
    %c0_11 = arith.constant 0 : index
    %c0_12 = arith.constant 0 : index
    %16 = vector.load %arg6[%c0_11, %c0_12] : memref<1x32xf32, #tpu.memory_space<vmem>>, vector<1x32xf32>
    %17 = vector.broadcast %16 : vector<1x32xf32> to vector<8x32xf32>
    %18 = arith.addf %15, %17 : vector<8x32xf32>
    %c0_13 = arith.constant 0 : index
    %c0_14 = arith.constant 0 : index
    %19 = vector.load %arg7[%c0_13, %c0_14] : memref<8x32xf32, #tpu.memory_space<vmem>>, vector<8x32xf32>
    tpu.vector_store %arg7[%c0_13, %c0_14], %18 {strides = array<i32>} : memref<8x32xf32, #tpu.memory_space<vmem>>, vector<8x32xf32>,
    return
  }
  func.func @transform_0(%arg0: i32, %arg1: i32) -> (i32, i32) {
    %c0_i32 = arith.constant 0 : i32
    %c0_i32_0 = arith.constant 0 : i32
    return %arg0, %c0_i32 : i32, i32
  }
  func.func @transform_1(%arg0: i32, %arg1: i32) -> (i32, i32) {
    %c0_i32 = arith.constant 0 : i32
    %c0_i32_0 = arith.constant 0 : i32
    return %c0_i32, %arg1 : i32, i32
  }
  func.func @transform_2(%arg0: i32, %arg1: i32) -> (i32, i32) {
    %c0_i32 = arith.constant 0 : i32
    %c0_i32_0 = arith.constant 0 : i32
    return %c0_i32, %arg1 : i32, i32
  }
  func.func @transform_3(%arg0: i32, %arg1: i32) -> (i32, i32) {
    %c0_i32 = arith.constant 0 : i32
    %c0_i32_0 = arith.constant 0 : i32
    return %arg1, %c0_i32 : i32, i32
  }
  func.func @transform_4(%arg0: i32, %arg1: i32) -> (i32, i32) {
    %c0_i32 = arith.constant 0 : i32
    %c0_i32_0 = arith.constant 0 : i32
    %c0_i32_1 = arith.constant 0 : i32
    return %c0_i32, %c0_i32_0 : i32, i32
  }
  func.func @transform_5(%arg0: i32, %arg1: i32) -> (i32, i32) {
    %c0_i32 = arith.constant 0 : i32
    %c0_i32_0 = arith.constant 0 : i32
    return %arg0, %c0_i32 : i32, i32
  }
}

</mosaic_0001>

<llo_original>
// kernel: tpu_custom_call.1
$region0: #{tpu_custom_call.1}
  #allocation0 [shape = 'u32[]', space=smem, size = 0x4, offset = 0x4, fixed_abs, tag = 'smem constant byte address 0x4 - core index']
  #allocation1 [shape = 'u32[144,128]{1,0:T(1,128)}', space=vmem, size = 0x12000, scoped, tag = 'internal scratch']
  #allocation2 [shape = 'f32[8,128]{1,0:T(8,128)}', space=vmem, size = 0x1000, scoped, tag = 'scratch operand']
  %s0 = inlined_call_operand.vmem [shape: f32[16,32], index: 0, kind: input, shape index: {}]
  %s1 = inlined_call_operand.vmem [shape: f32[32,64], index: 1, kind: input, shape index: {}]
  %s2 = inlined_call_operand.vmem [shape: f32[1,64], index: 2, kind: input, shape index: {}]
  %s3 = inlined_call_operand.vmem [shape: f32[64,32], index: 3, kind: input, shape index: {}]
  %s4 = inlined_call_operand.vmem [shape: f32[1,32], index: 4, kind: input, shape index: {}]
  %s5 = inlined_call_operand.hbm [shape: f32[16,32], index: 5, kind: output, shape index: {}]
  %s6 = sld [smem:[#allocation0]]
  $region53: #{tpu_custom_call.1} parent=0
    _
  %s8 = ssub.s32 1, %s6
  %s9 = scalar_select 0, %s8, %s6
  $region1: #{tpu_custom_call.1} parent=0
    #allocation3 [shape = 'u8[8192]{0}', space=vmem, size = 0x2000, scoped, tag = 'output window, operand 0']
    #allocation4 [shape = 's32[2]{0}', space=sflag, size = 0x8, scoped, tag = 'scoped memory for tpu_custom_call.1']
    %10 = vsyncpa [#allocation4], 0
    %s11 = scalar_lea.sflag [#allocation4], 1
    %12 = vsyncpa %s11, 0
    loop: start=0, step=1, limit=4
    $region2: #{tpu_custom_call.1} parent=1 // loop_pre_header
      _
    $region3: #{tpu_custom_call.1} parent=1 // loop_header
      %s14 = sphi 0, %s18
      %p15 = scmp.ge.s32.totalorder %s14, 4
      %s21 = sphi 0, %s33
      %s22 = sphi 0, %s29
      %s23 = sphi 0, %s21
      %s24 = sphi 0, %s22
      %s25 = sphi 0, %s23
      %s26 = sphi 0, %s24
      %s36 = sphi 0, %s38
      %s39 = sphi 0, %s36
      %s40 = sphi 0, %s39
      %s56 = sphi 0, %s40
      %s62 = sphi 0, %s64
      %s65 = sphi 0, %s62
      %s66 = sphi 0, %s65
      %s82 = sphi 0, %s66
      %s88 = sphi 0, %s90
      %s91 = sphi 0, %s88
      %s92 = sphi 0, %s91
      %s108 = sphi 0, %s92
      %s114 = sphi 0, %s116
      %s117 = sphi 0, %s114
      %s118 = sphi 0, %s117
      %s134 = sphi 0, %s118
      %s138 = sphi 0, %s138
      %s140 = sphi 0, %s138
      %s141 = sphi 0, %s140
      %s155 = sphi 0, %s141
      %s161 = sphi 0, %s163
      %s164 = sphi 0, %s161
      %s165 = sphi 0, %s164
      %s181 = sphi 0, %s165
    $region4: #{tpu_custom_call.1} parent=1 // loop_header_branch
      %17 = sbr.rel (%p15) target = $region8
    $region5: #{tpu_custom_call.1} parent=1 // loop_body
      %s19 = ssub.s32 %s14, 1
      %s20 = ssub.s32 %s14, 2
      %s27 = sadd.s32 1, %s22
      %p28 = scmp.ge.s32.totalorder %s27, 1
      %s29 = scalar_select %p28, 0, %s27
      %s30 = sadd.s32 1, %s21
      %s31 = scalar_select %p28, %s30, %s21
      %p32 = scmp.ge.s32.totalorder %s31, 2
      %s33 = scalar_select %p32, 0, %s31
      %s34 = ssub.s32 %s21, %s33
      %p35 = scmp.eq.s32.totalorder %s34, 0
      %s37 = sadd.s32 %s36, 1
      %s38 = scalar_select %p35, %s36, %s37
      %p41 = pneg %p35
      %p42 = scmp.eq.s32.totalorder %s14, 1
      %p43 = por %p41, %p42
      %p44 = scmp.ne.s32.totalorder %s36, %s39
      %p45 = scmp.eq.s32.totalorder %s14, 0
      %p46 = por %p44, %p45
      %p47 = scmp.ne.s32.totalorder %s36, %s39
      %p48 = scmp.eq.s32.totalorder %s19, 1
      %p49 = por %p47, %p48
      %p50 = scmp.ne.s32.totalorder %s39, %s40
      %p51 = scmp.eq.s32.totalorder %s19, 0
      %p52 = por %p50, %p51
      %p53 = scmp.ne.s32.totalorder %s39, %s40
      %p54 = scmp.eq.s32.totalorder %s20, 1
      %p55 = por %p53, %p54
      %p57 = scmp.ne.s32.totalorder %s40, %s56
      %p58 = scmp.eq.s32.totalorder %s20, 0
      %p59 = por %p57, %p58
      %s60 = ssub.s32 %s22, %s29
      %p61 = scmp.eq.s32.totalorder %s60, 0
      %s63 = sadd.s32 %s62, 1
      %s64 = scalar_select %p61, %s62, %s63
      %p67 = pneg %p61
      %p68 = scmp.eq.s32.totalorder %s14, 1
      %p69 = por %p67, %p68
      %p70 = scmp.ne.s32.totalorder %s62, %s65
      %p71 = scmp.eq.s32.totalorder %s14, 0
      %p72 = por %p70, %p71
      %p73 = scmp.ne.s32.totalorder %s62, %s65
      %p74 = scmp.eq.s32.totalorder %s19, 1
      %p75 = por %p73, %p74
      %p76 = scmp.ne.s32.totalorder %s65, %s66
      %p77 = scmp.eq.s32.totalorder %s19, 0
      %p78 = por %p76, %p77
      %p79 = scmp.ne.s32.totalorder %s65, %s66
      %p80 = scmp.eq.s32.totalorder %s20, 1
      %p81 = por %p79, %p80
      %p83 = scmp.ne.s32.totalorder %s66, %s82
      %p84 = scmp.eq.s32.totalorder %s20, 0
      %p85 = por %p83, %p84
      %s86 = ssub.s32 %s22, %s29
      %p87 = scmp.eq.s32.totalorder %s86, 0
      %s89 = sadd.s32 %s88, 1
      %s90 = scalar_select %p87, %s88, %s89
      %p93 = pneg %p87
      %p94 = scmp.eq.s32.totalorder %s14, 1
      %p95 = por %p93, %p94
      %p96 = scmp.ne.s32.totalorder %s88, %s91
      %p97 = scmp.eq.s32.totalorder %s14, 0
      %p98 = por %p96, %p97
      %p99 = scmp.ne.s32.totalorder %s88, %s91
      %p100 = scmp.eq.s32.totalorder %s19, 1
      %p101 = por %p99, %p100
      %p102 = scmp.ne.s32.totalorder %s91, %s92
      %p103 = scmp.eq.s32.totalorder %s19, 0
      %p104 = por %p102, %p103
      %p105 = scmp.ne.s32.totalorder %s91, %s92
      %p106 = scmp.eq.s32.totalorder %s20, 1
      %p107 = por %p105, %p106
      %p109 = scmp.ne.s32.totalorder %s92, %s108
      %p110 = scmp.eq.s32.totalorder %s20, 0
      %p111 = por %p109, %p110
      %s112 = ssub.s32 %s22, %s29
      %p113 = scmp.eq.s32.totalorder %s112, 0
      %s115 = sadd.s32 %s114, 1
      %s116 = scalar_select %p113, %s114, %s115
      %p119 = pneg %p113
      %p120 = scmp.eq.s32.totalorder %s14, 1
      %p121 = por %p119, %p120
      %p122 = scmp.ne.s32.totalorder %s114, %s117
      %p123 = scmp.eq.s32.totalorder %s14, 0
      %p124 = por %p122, %p123
      %p125 = scmp.ne.s32.totalorder %s114, %s117
      %p126 = scmp.eq.s32.totalorder %s19, 1
      %p127 = por %p125, %p126
      %p128 = scmp.ne.s32.totalorder %s117, %s118
      %p129 = scmp.eq.s32.totalorder %s19, 0
      %p130 = por %p128, %p129
      %p131 = scmp.ne.s32.totalorder %s117, %s118
      %p132 = scmp.eq.s32.totalorder %s20, 1
      %p133 = por %p131, %p132
      %p135 = scmp.ne.s32.totalorder %s118, %s134
      %p136 = scmp.eq.s32.totalorder %s20, 0
      %p137 = por %p135, %p136
      %s139 = sadd.s32 %s138, 1
      %p142 = scmp.eq.s32.totalorder %s14, 1
      %p143 = scmp.ne.s32.totalorder %s138, %s140
      %p144 = scmp.eq.s32.totalorder %s14, 0
      %p145 = por %p143, %p144
      %p146 = scmp.ne.s32.totalorder %s138, %s140
      %p147 = scmp.eq.s32.totalorder %s19, 1
      %p148 = por %p146, %p147
      %p149 = scmp.ne.s32.totalorder %s140, %s141
      %p150 = scmp.eq.s32.totalorder %s19, 0
      %p151 = por %p149, %p150
      %p152 = scmp.ne.s32.totalorder %s140, %s141
      %p153 = scmp.eq.s32.totalorder %s20, 1
      %p154 = por %p152, %p153
      %p156 = scmp.ne.s32.totalorder %s141, %s155
      %p157 = scmp.eq.s32.totalorder %s20, 0
      %p158 = por %p156, %p157
      %s159 = ssub.s32 %s21, %s33
      %p160 = scmp.eq.s32.totalorder %s159, 0
      %s162 = sadd.s32 %s161, 1
      %s163 = scalar_select %p160, %s161, %s162
      %p166 = pneg %p160
      %p167 = scmp.eq.s32.totalorder %s14, 1
      %p168 = por %p166, %p167
      %p169 = scmp.ne.s32.totalorder %s161, %s164
      %p170 = scmp.eq.s32.totalorder %s14, 0
      %p171 = por %p169, %p170
      %p172 = scmp.ne.s32.totalorder %s161, %s164
      %p173 = scmp.eq.s32.totalorder %s19, 1
      %p174 = por %p172, %p173
      %p175 = scmp.ne.s32.totalorder %s164, %s165
      %p176 = scmp.eq.s32.totalorder %s19, 0
      %p177 = por %p175, %p176
      %p178 = scmp.ne.s32.totalorder %s164, %s165
      %p179 = scmp.eq.s32.totalorder %s20, 1
      %p180 = por %p178, %p179
      %p182 = scmp.ne.s32.totalorder %s165, %s181
      %p183 = scmp.eq.s32.totalorder %s20, 0
      %p184 = por %p182, %p183
      %p185 = scmp.le.s32.totalorder 1, %s14
      %p186 = scmp.lt.s32.totalorder %s14, 3
      %p187 = pnand %p185, %p186
      %p188 = pneg %p187
      // Predicated region
      $region9: #{tpu_custom_call.1} parent=5 // pred_check
        _
      $region10: #{tpu_custom_call.1} parent=5 // pred_check_branch
        %190 = sbr.rel (%p187) target = $region12
      $region11: #{tpu_custom_call.1} parent=5 // pred_region
        %s191 = ssub.s32 %s14, 1
        // Predicated region
        $region13: #{tpu_custom_call.1} parent=11 // pred_check
          %p192 = pneg %p78
        $region14: #{tpu_custom_call.1} parent=11 // pred_check_branch
          %194 = sbr.rel (%p192) target = $region16
        $region15: #{tpu_custom_call.1} parent=11 // pred_region
          %p195 = scmp.lt.s32.totalorder %s24, 0
          %s196 = scalar_select %p195, %s24, 0
          %s197 = smul.addr %s196, 8
          %s198 = scalar_lea.vmem %s1, %s197
        $region16: #{tpu_custom_call.1} parent=11 // pred_fallthru
          _
        // Predicated region
        $region17: #{tpu_custom_call.1} parent=11 // pred_check
          %p199 = pneg %p104
        $region18: #{tpu_custom_call.1} parent=11 // pred_check_branch
          %201 = sbr.rel (%p199) target = $region20
        $region19: #{tpu_custom_call.1} parent=11 // pred_region
          %p202 = scmp.lt.s32.totalorder %s24, 0
          %s203 = scalar_select %p202, %s24, 0
          %s204 = scalar_lea.vmem %s2, %s203
        $region20: #{tpu_custom_call.1} parent=11 // pred_fallthru
          _
        // Predicated region
        $region21: #{tpu_custom_call.1} parent=11 // pred_check
          %p205 = pneg %p130
        $region22: #{tpu_custom_call.1} parent=11 // pred_check_branch
          %207 = sbr.rel (%p205) target = $region24
        $region23: #{tpu_custom_call.1} parent=11 // pred_region
          %s208 = smul.u32 8, %s24
          %p209 = scmp.lt.s32.totalorder %s208, 7
          %s210 = scalar_select %p209, %s208, 7
          %s211 = smul.addr %s210, 8
          %s212 = scalar_lea.vmem %s3, %s211
          %s213 = smul.u32 8, %s24
        $region24: #{tpu_custom_call.1} parent=11 // pred_fallthru
          _
        // Predicated region
        $region25: #{tpu_custom_call.1} parent=11 // pred_check
          %p214 = pneg %p151
        $region26: #{tpu_custom_call.1} parent=11 // pred_check_branch
          %216 = sbr.rel (%p214) target = $region28
        $region27: #{tpu_custom_call.1} parent=11 // pred_region
          _
        $region28: #{tpu_custom_call.1} parent=11 // pred_fallthru
          _
      $region12: #{tpu_custom_call.1} parent=5 // pred_fallthru
        _
      %p217 = scmp.lt.s32.totalorder %s14, 2
      // Predicated region
      $region29: #{tpu_custom_call.1} parent=5 // pred_check
        %p218 = pneg %p217
      $region30: #{tpu_custom_call.1} parent=5 // pred_check_branch
        %220 = sbr.rel (%p218) target = $region32
      $region31: #{tpu_custom_call.1} parent=5 // pred_region
        // Predicated region
        $region33: #{tpu_custom_call.1} parent=31 // pred_check
          %p221 = pneg %p46
        $region34: #{tpu_custom_call.1} parent=31 // pred_check_branch
          %223 = sbr.rel (%p221) target = $region36
        $region35: #{tpu_custom_call.1} parent=31 // pred_region
          %p224 = scmp.lt.s32.totalorder %s21, 1
          %s225 = scalar_select %p224, %s21, 1
          %s226 = smul.addr %s225, 8
          %s227 = scalar_lea.vmem %s0, %s226
        $region36: #{tpu_custom_call.1} parent=31 // pred_fallthru
          _
      $region32: #{tpu_custom_call.1} parent=5 // pred_fallthru
        _
      %p228 = scmp.le.s32.totalorder 1, %s14
      %p229 = scmp.lt.s32.totalorder %s14, 3
      %p230 = pnand %p228, %p229
      %p231 = pneg %p230
      // Predicated region
      $region37: #{tpu_custom_call.1} parent=5 // pred_check
        _
      $region38: #{tpu_custom_call.1} parent=5 // pred_check_branch
        %233 = sbr.rel (%p230) target = $region40
      $region39: #{tpu_custom_call.1} parent=5 // pred_region
        %s234 = ssub.s32 %s14, 1
        %p235 = scmp.lt.s32.totalorder %s23, 1
        %s236 = scalar_select %p235, %s23, 1
        %s237 = smul.addr %s236, 8
        %s238 = scalar_lea.vmem %s0, %s237
        %p239 = pneg %p52
        %p240 = pneg %p49
        %p241 = scmp.lt.s32.totalorder %s24, 0
        %s242 = scalar_select %p241, %s24, 0
        %s243 = smul.addr %s242, 8
        %s244 = scalar_lea.vmem %s1, %s243
        %p245 = pneg %p78
        %p246 = pneg %p75
        %p247 = scmp.lt.s32.totalorder %s24, 0
        %s248 = scalar_select %p247, %s24, 0
        %s249 = scalar_lea.vmem %s2, %s248
        %p250 = pneg %p104
        %p251 = pneg %p101
        %s252 = smul.u32 8, %s24
        %p253 = scmp.lt.s32.totalorder %s252, 7
        %s254 = scalar_select %p253, %s252, 7
        %s255 = smul.addr %s254, 8
        %s256 = scalar_lea.vmem %s3, %s255
        %p257 = pneg %p130
        %p258 = pneg %p127
        %p259 = pneg %p151
        %p260 = pneg %p148
        %p261 = pneg %p177
        %p262 = pneg %p174
        %s263 = sand.u32 %s164, 1
        %s264 = scalar_lea.sflag [#allocation4], %s263
        %s265 = sand.u32 %s164, 1
        %s266 = smul.addr %s265, 8
        %s267 = scalar_lea.vmem [#allocation3], %s266
        %p268 = scmp.lt.s32.totalorder %s23, 1
        %s269 = scalar_select %p268, %s23, 1
        %s270 = smul.addr %s269, 8
        %s271 = scalar_lea.vmem %s0, %s270
        %p272 = scmp.lt.s32.totalorder %s24, 0
        %s273 = scalar_select %p272, %s24, 0
        %s274 = smul.addr %s273, 8
        %s275 = scalar_lea.vmem %s1, %s274
        %p276 = scmp.lt.s32.totalorder %s24, 0
        %s277 = scalar_select %p276, %s24, 0
        %s278 = scalar_lea.vmem %s2, %s277
        %s279 = smul.u32 8, %s24
        %p280 = scmp.lt.s32.totalorder %s279, 7
        %s281 = scalar_select %p280, %s279, 7
        %s282 = smul.addr %s281, 8
        %s283 = scalar_lea.vmem %s3, %s282
        %s284 = smul.u32 8, %s24
        %v285 = vld [vmem:[%s271] sm:$0xff]
        %v286 = vld [vmem:[%s275] sm:$0xff]
        %v287 = vld [vmem:[%s275 + $0x8] sm:$0xff]
        %v288 = vld [vmem:[%s275 + $0x10] sm:$0xff]
        %v289 = vld [vmem:[%s275 + $0x18] sm:$0xff]
        %v290 = vld [vmem:[%s278] sm:$0x1]
        %v292 = vlaneseq
        %v293 = vshrl.u32 %v292, 7
        %v294 = vsub.s32 0, %v293
        %v295 = vrot.slane %v290, %v294
        %vm297 = vcmask 261120
        %v299 = vsel %vm297, %v285, 0
        %301 = vmatprep.subr.mxu0 0.0
        %302 = vmatpush1.msra.mxu0 %v286
        %303 = vmatprep.subr.mxu0 0.0
        %304 = vmatpush1.msra.mxu0 %v287
        %305 = vmatprep.subr.mxu0 0.0
        %306 = vmatpush1.msra.mxu0 %v288
        %307 = vmatprep.subr.mxu0 0.0
        %308 = vmatpush1.msra.mxu0 %v289
        %309 = vmatprep.subr.mxu0 0.0
        %310 = vmatpush1.msra.mxu0 0.0
        %311 = vmatprep.subr.mxu0 0.0
        %312 = vmatpush1.msra.mxu0 0.0
        %313 = vmatprep.subr.mxu0 0.0
        %314 = vmatpush1.msra.mxu0 0.0
        %315 = vmatprep.subr.mxu0 0.0
        %316 = vmatpush1.msra.mxu0 0.0
        %317 = vmatprep.subr.mxu0 0.0
        %318 = vmatpush1.msra.mxu0 0.0
        %319 = vmatprep.subr.mxu0 0.0
        %320 = vmatpush1.msra.mxu0 0.0
        %321 = vmatprep.subr.mxu0 0.0
        %322 = vmatpush1.msra.mxu0 0.0
        %323 = vmatprep.subr.mxu0 0.0
        %324 = vmatpush1.msra.mxu0 0.0
        %325 = vmatprep.subr.mxu0 0.0
        %326 = vmatpush1.msra.mxu0 0.0
        %327 = vmatprep.subr.mxu0 0.0
        %328 = vmatpush1.msra.mxu0 0.0
        %329 = vmatprep.subr.mxu0 0.0
        %330 = vmatpush1.msra.mxu0 0.0
        %331 = vmatprep.subr.mxu0 0.0
        %332 = vmatpush1.msra.mxu0 0.0
        %333 = vmatprep.subr.mxu0 0.0
        %334 = vmatpush1.msra.mxu0 0.0
        %335 = vmatprep.subr.mxu0 0.0
        %336 = vmatpush1.msra.mxu0 0.0
        %337 = vmatprep.subr.mxu0 0.0
        %338 = vmatpush1.msra.mxu0 0.0
        %339 = vmatprep.subr.mxu0 0.0
        %340 = vmatpush1.msra.mxu0 0.0
        %341 = vmatprep.subr.mxu0 0.0
        %342 = vmatpush1.msra.mxu0 0.0
        %343 = vmatprep.subr.mxu0 0.0
        %344 = vmatpush1.msra.mxu0 0.0
        %345 = vmatprep.subr.mxu0 0.0
        %346 = vmatpush1.msra.mxu0 0.0
        %347 = vmatprep.subr.mxu0 0.0
        %348 = vmatpush1.msra.mxu0 0.0
        %349 = vmatprep.subr.mxu0 0.0
        %350 = vmatpush1.msra.mxu0 0.0
        %351 = vmatprep.subr.mxu0 0.0
        %352 = vmatpush1.msra.mxu0 0.0
        %353 = vmatprep.subr.mxu0 0.0
        %354 = vmatpush1.msra.mxu0 0.0
        %355 = vmatprep.subr.mxu0 0.0
        %356 = vmatpush1.msra.mxu0 0.0
        %357 = vmatprep.subr.mxu0 0.0
        %358 = vmatpush1.msra.mxu0 0.0
        %359 = vmatprep.subr.mxu0 0.0
        %360 = vmatpush1.msra.mxu0 0.0
        %361 = vmatprep.subr.mxu0 0.0
        %362 = vmatpush1.msra.mxu0 0.0
        %363 = vmatprep.subr.mxu0 0.0
        %364 = vmatpush1.msra.mxu0 0.0
        %365 = vmatprep.mubr.f32.mxu0 0.0
        %366 = vmatmul.mubr.f32.gmra.mrb[0].mxu0 %v299
        %v367 = vpop.f32.mrb[0].mxu0
        %v368 = vadd.f32 %v295, %v367
        %v369 = vpop.f32.mrb[0].mxu0
        %370 = vdwg.mxu0
        %v371 = vmul.f32 %v368, 0.5
        %v372 = vmul.f32 %v368, 0.70710677
        %v373 = verf.f32.pop %v372
        %v374 = vadd.f32 %v373, 1.0
        %v375 = vmul.f32 %v371, %v374
        %v376 = vld [vmem:[%s283] sm:$0xff]
        %v377 = vld [vmem:[%s283 + $0x8] sm:$0xff]
        %v378 = vld [vmem:[%s283 + $0x10] sm:$0xff]
        %v379 = vld [vmem:[%s283 + $0x18] sm:$0xff]
        %v380 = vld [vmem:[%s283 + $0x20] sm:$0xff]
        %v381 = vld [vmem:[%s283 + $0x28] sm:$0xff]
        %v382 = vld [vmem:[%s283 + $0x30] sm:$0xff]
        %v383 = vld [vmem:[%s283 + $0x38] sm:$0xff]
        %v384 = vld [vmem:[%s4] sm:$0x1]
        %v386 = vlaneseq
        %v387 = vshrl.u32 %v386, 7
        %v388 = vsub.s32 0, %v387
        %v389 = vrot.slane %v384, %v388
        %vm391 = vcmask 523264
        %v393 = vsel %vm391, %v375, 0
        %395 = vmatprep.subr.mxu0 0.0
        %396 = vmatpush1.msra.mxu0 %v376
        %397 = vmatprep.subr.mxu0 0.0
        %398 = vmatpush1.msra.mxu0 %v377
        %399 = vmatprep.subr.mxu0 0.0
        %400 = vmatpush1.msra.mxu0 %v378
        %401 = vmatprep.subr.mxu0 0.0
        %402 = vmatpush1.msra.mxu0 %v379
        %403 = vmatprep.subr.mxu0 0.0
        %404 = vmatpush1.msra.mxu0 %v380
        %405 = vmatprep.subr.mxu0 0.0
        %406 = vmatpush1.msra.mxu0 %v381
        %407 = vmatprep.subr.mxu0 0.0
        %408 = vmatpush1.msra.mxu0 %v382
        %409 = vmatprep.subr.mxu0 0.0
        %410 = vmatpush1.msra.mxu0 %v383
        %411 = vmatprep.subr.mxu0 0.0
        %412 = vmatpush1.msra.mxu0 0.0
        %413 = vmatprep.subr.mxu0 0.0
        %414 = vmatpush1.msra.mxu0 0.0
        %415 = vmatprep.subr.mxu0 0.0
        %416 = vmatpush1.msra.mxu0 0.0
        %417 = vmatprep.subr.mxu0 0.0
        %418 = vmatpush1.msra.mxu0 0.0
        %419 = vmatprep.subr.mxu0 0.0
        %420 = vmatpush1.msra.mxu0 0.0
        %421 = vmatprep.subr.mxu0 0.0
        %422 = vmatpush1.msra.mxu0 0.0
        %423 = vmatprep.subr.mxu0 0.0
        %424 = vmatpush1.msra.mxu0 0.0
        %425 = vmatprep.subr.mxu0 0.0
        %426 = vmatpush1.msra.mxu0 0.0
        %427 = vmatprep.subr.mxu0 0.0
        %428 = vmatpush1.msra.mxu0 0.0
        %429 = vmatprep.subr.mxu0 0.0
        %430 = vmatpush1.msra.mxu0 0.0
        %431 = vmatprep.subr.mxu0 0.0
        %432 = vmatpush1.msra.mxu0 0.0
        %433 = vmatprep.subr.mxu0 0.0
        %434 = vmatpush1.msra.mxu0 0.0
        %435 = vmatprep.subr.mxu0 0.0
        %436 = vmatpush1.msra.mxu0 0.0
        %437 = vmatprep.subr.mxu0 0.0
        %438 = vmatpush1.msra.mxu0 0.0
        %439 = vmatprep.subr.mxu0 0.0
        %440 = vmatpush1.msra.mxu0 0.0
        %441 = vmatprep.subr.mxu0 0.0
        %442 = vmatpush1.msra.mxu0 0.0
        %443 = vmatprep.subr.mxu0 0.0
        %444 = vmatpush1.msra.mxu0 0.0
        %445 = vmatprep.subr.mxu0 0.0
        %446 = vmatpush1.msra.mxu0 0.0
        %447 = vmatprep.subr.mxu0 0.0
        %448 = vmatpush1.msra.mxu0 0.0
        %449 = vmatprep.subr.mxu0 0.0
        %450 = vmatpush1.msra.mxu0 0.0
        %451 = vmatprep.subr.mxu0 0.0
        %452 = vmatpush1.msra.mxu0 0.0
        %453 = vmatprep.subr.mxu0 0.0
        %454 = vmatpush1.msra.mxu0 0.0
        %455 = vmatprep.subr.mxu0 0.0
        %456 = vmatpush1.msra.mxu0 0.0
        %457 = vmatprep.subr.mxu0 0.0
        %458 = vmatpush1.msra.mxu0 0.0
        %459 = vmatprep.mubr.f32.mxu0 0.0
        %460 = vmatmul.mubr.f32.gmra.mrb[0].mxu0 %v393
        %v461 = vpop.f32.mrb[0].mxu0
        %v462 = vadd.f32 %v389, %v461
        %v463 = vpop.f32.mrb[0].mxu0
        %464 = vdwg.mxu0
        %465 = vst.msk [vmem:[%s267] sm:$0xff] %vm297, %v462
        %s466 = sand.u32 %s164, 1
        %s467 = scalar_lea.sflag [#allocation4], %s466
        %s468 = sand.u32 %s164, 1
        %s469 = smul.addr %s468, 8
        %s470 = scalar_lea.vmem [#allocation3], %s469
        // Predicated region
        $region41: #{tpu_custom_call.1} parent=39 // pred_check
          %p471 = pneg %p174
        $region42: #{tpu_custom_call.1} parent=39 // pred_check_branch
          %473 = sbr.rel (%p471) target = $region44
        $region43: #{tpu_custom_call.1} parent=39 // pred_region
          %s475 = ssub.s32 128, 128
          %476 = vsyncadd %s467, %s475
          %s477 = smul.addr %s23, 128
          %s478 = scalar_lea.hbm %s5, %s477
          %s480 = sshll.u32 %s470, 4
          %s481 = int_to_ptr.vmem [resolvable:$true] %s480
          %483 = dma.vmem_to_hbm [thread:$0]  %s481, 128, %s478, %s467
        $region44: #{tpu_custom_call.1} parent=39 // pred_fallthru
          _
      $region40: #{tpu_custom_call.1} parent=5 // pred_fallthru
        _
      %p484 = scmp.le.s32.totalorder 2, %s14
      // Predicated region
      $region45: #{tpu_custom_call.1} parent=5 // pred_check
        %p485 = pneg %p484
      $region46: #{tpu_custom_call.1} parent=5 // pred_check_branch
        %487 = sbr.rel (%p485) target = $region48
      $region47: #{tpu_custom_call.1} parent=5 // pred_region
        %s488 = ssub.s32 %s14, 2
        // Predicated region
        $region49: #{tpu_custom_call.1} parent=47 // pred_check
          %p489 = pneg %p180
        $region50: #{tpu_custom_call.1} parent=47 // pred_check_branch
          %491 = sbr.rel (%p489) target = $region52
        $region51: #{tpu_custom_call.1} parent=47 // pred_region
          %s492 = sand.u32 %s165, 1
          %s493 = scalar_lea.sflag [#allocation4], %s492
          %s494 = sand.u32 %s165, 1
          %s495 = smul.addr %s494, 8
          %s496 = scalar_lea.vmem [#allocation3], %s495
          %497 = dma.done %s493, 128
        $region52: #{tpu_custom_call.1} parent=47 // pred_fallthru
          _
      $region48: #{tpu_custom_call.1} parent=5 // pred_fallthru
        _
    $region6: #{tpu_custom_call.1} parent=1 // loop_footer
      %s18 = sadd.s32 1, %s14
    $region7: #{tpu_custom_call.1} parent=1 // loop_footer_branch
      %13 = sbr.rel target = $region3
    $region8: #{tpu_custom_call.1} parent=1 // loop_exit
      _
    %498 = vsyncpa [#allocation4], 1
    %s499 = scalar_lea.sflag [#allocation4], 1
    %500 = vsyncpa %s499, 1

</llo_original>
